<compile_context>
chip_gen: v7x
topology: tpu7x:2x2x1
jax: 0.10.0
libtpu: 0.0.40
codegen_flags: <defaults>
</compile_context>

<pallas_src>
import functools

import jax
import jax.numpy as jnp
from jax.experimental import pallas as pl
from jax.experimental.pallas import tpu as pltpu


def _round_up(x, m):
    return ((x + m - 1) // m) * m


def _choose_block_m(batch):
    """Small batch: one tile covering the 8-padded batch (no wasted rows).
    Large batch: 256-row tiles so grid >= 2 ("parallel" really shards on v7x,
    and M=256 fully streams the 256-wide MXU on v6e/v7x)."""
    if batch <= 256:
        return _round_up(batch, 8)
    return 256


def _leaky_relu(h, slope=0.2):
    return jnp.where(h >= 0, h, slope * h)


# ---------------------------------------------------------------------------
# Pallas kernel: the full generator MLP hot path (one batch tile per grid step)
#   5 x (matmul + bias) with LeakyReLU(0.2) between, Tanh at the end,
#   then (tanh + 1) / 2 and the per-column-range (max - min) scaling,
#   all fused in one kernel invocation.
#   Weights / LHS are bf16 (MXU operands); accumulation + elementwise are f32.
# ---------------------------------------------------------------------------
def _gen_mlp_kernel(x_ref, scale_ref,
                    w0, b0, w1, b1, w2, b2, w3, b3, w4, b4,
                    out_ref):
    h = jnp.dot(x_ref[...], w0[...],
                preferred_element_type=jnp.float32) + b0[...]
    h = _leaky_relu(h)
    for w, b in ((w1, b1), (w2, b2), (w3, b3)):
        h = jnp.dot(h.astype(jnp.bfloat16), w[...],
                    preferred_element_type=jnp.float32) + b[...]
        h = _leaky_relu(h)
    h = jnp.dot(h.astype(jnp.bfloat16), w4[...],
                preferred_element_type=jnp.float32) + b4[...]
    # fused epilogue: (tanh + 1)/2 then per-column (max-min) scale.
    # padded columns carry scale 0 -> exact zeros in the padded region.
    out_ref[...] = (jnp.tanh(h) * 0.5 + 0.5) * scale_ref[...]


def mlp_forward(x_pad, scale_row, params_pad, *, block_m):
    """x_pad: [B_pad, K0_pad] bf16 (B_pad % block_m == 0, K0_pad % 128 == 0).
    scale_row: [1, out_pad] f32 per-column output scale (0 on padded columns).
    params_pad: list of 5 (W_pad [din_pad, dout_pad] bf16, b_pad [1, dout_pad] f32)."""
    B_pad, K_pad = x_pad.shape
    out_pad = params_pad[-1][0].shape[1]
    flat = []
    for w, b in params_pad:
        flat += [w, b]

    def _const_spec(a):
        nd = a.ndim
        return pl.BlockSpec(a.shape, lambda i, _nd=nd: (0,) * _nd)

    return pl.pallas_call(
        _gen_mlp_kernel,
        out_shape=jax.ShapeDtypeStruct((B_pad, out_pad), jnp.float32),
        grid=(B_pad // block_m,),
        in_specs=[pl.BlockSpec((block_m, K_pad), lambda i: (i, 0)),
                  _const_spec(scale_row)]
                 + [_const_spec(a) for a in flat],
        out_specs=pl.BlockSpec((block_m, out_pad), lambda i: (i, 0)),
        compiler_params=pltpu.CompilerParams(
            dimension_semantics=("parallel",),   # >1 batch tile -> both TCs on v7x
            vmem_limit_bytes=8 << 20,            # actual need ~1 MiB; keep headroom
        ),
    )(x_pad, scale_row, *flat)


# ---------------------------------------------------------------------------
# Pure-JAX reference of the same (padded, bf16-weight) MLP, for validation.
# ---------------------------------------------------------------------------
def _ref_mlp(x_pad, scale_row, params_pad):
    h = x_pad
    for i, (w, b) in enumerate(params_pad):
        h = jnp.dot(h.astype(jnp.bfloat16), w,
                    preferred_element_type=jnp.float32) + b
        h = _leaky_relu(h) if i < 4 else jnp.tanh(h)
    return (h * 0.5 + 0.5) * scale_row


# ---------------------------------------------------------------------------
# JAX-side Generator (parameter setup + concat / padding / slicing glue)
# ---------------------------------------------------------------------------
class Generator:
    def __init__(self, node_features_dim=8, edge_time_dim=1, n_neighbors=4,
                 nei_embedding_dim=8, edge_features_dim=8, time_diff_dim=1,
                 edge_time_gaps_dim=1, batch_size=8, key=None):
        self.batch_size = batch_size
        self.node_features_dim = node_features_dim
        self.edge_time_dim = edge_time_dim
        self.n_neighbors = n_neighbors
        self.nei_embedding_dim = nei_embedding_dim
        self.edge_features_dim = edge_features_dim
        self.time_diff_dim = time_diff_dim
        self.edge_time_gaps_dim = edge_time_gaps_dim

        self.layer0_dim = (node_features_dim + edge_time_dim
                           + n_neighbors * (nei_embedding_dim + edge_features_dim
                                            + nei_embedding_dim + edge_time_gaps_dim))
        self.layer1_dim = (node_features_dim + edge_time_dim
                           + n_neighbors * (nei_embedding_dim + edge_features_dim
                                            + edge_time_gaps_dim))
        self.out_dim = (node_features_dim
                        + n_neighbors * (nei_embedding_dim + edge_features_dim
                                         + edge_time_gaps_dim))
        self.time_emb_dim = 200

        if key is None:
            key = jax.random.PRNGKey(0)

        def linear(k, din, dout):
            """PyTorch-style init on the TRUE fan-in, then zero-pad to 128-multiples.
            W is stored bf16 (MXU operand); bias stays f32."""
            kw, kb = jax.random.split(k)
            bound = 1.0 / (din ** 0.5)
            w = jax.random.uniform(kw, (din, dout), jnp.float32, -bound, bound)
            b = jax.random.uniform(kb, (1, dout), jnp.float32, -bound, bound)
            din_p, dout_p = _round_up(din, 128), _round_up(dout, 128)
            w_pad = jnp.zeros((din_p, dout_p), jnp.float32).at[:din, :dout].set(w)
            b_pad = jnp.zeros((1, dout_p), jnp.float32).at[:, :dout].set(b)
            return w_pad.astype(jnp.bfloat16), b_pad

        def make_mlp(k, L):
            dims = [(2 * L, 2 * L), (2 * L, L), (L, L), (L, 2 * L), (2 * L, self.out_dim)]
            ks = jax.random.split(k, len(dims))
            return [linear(ki, di, do) for ki, (di, do) in zip(ks, dims)]

        k0, k1 = jax.random.split(key)
        self.layer0_params = make_mlp(k0, self.layer0_dim)
        self.layer1_params = make_mlp(k1, self.layer1_dim)

        # one jitted end-to-end forward per layer (noise, concat, pallas_call,
        # scale reductions, slicing/reshape all fused into a single dispatch)
        self._fwd = {
            0: jax.jit(functools.partial(self._forward_impl, layer=0)),
            1: jax.jit(functools.partial(self._forward_impl, layer=1)),
        }

    # ---- jitted body -------------------------------------------------------
    def _forward_impl(self, source_node_features, timestamps_nodes,
                      neighbor_embeddings, edge_features, edge_gaps,
                      before_embedding, noise_key, layer):
        B = source_node_features.shape[0]

        if layer == 0:
            L = self.layer0_dim
            params = self.layer0_params
            # faithful port of: (torch.randn([B, L]) - 0.5) * 45
            noise = (jax.random.normal(noise_key, (B, L), jnp.float32) - 0.5) * 45.0
            x = jnp.concatenate([source_node_features, timestamps_nodes,
                                 neighbor_embeddings, edge_features,
                                 before_embedding, edge_gaps, noise], axis=1)
        else:
            L = self.layer1_dim
            params = self.layer1_params
            noise = (jax.random.normal(noise_key, (B, L), jnp.float32) - 0.5) * 45.0
            x = jnp.concatenate([source_node_features, timestamps_nodes,
                                 neighbor_embeddings, edge_features,
                                 edge_gaps, noise], axis=1)

        # pad batch only to the chosen tile size (multiple of 8, not 128) and
        # zero-pad features; padded cols stay 0 through the chain because the
        # padded weight rows/cols and biases are 0. x goes in as bf16 (MXU LHS).
        block_m = _choose_block_m(B)
        B_pad = _round_up(B, block_m)
        in_pad = params[0][0].shape[0]
        x_pad = (jnp.zeros((B_pad, in_pad), jnp.bfloat16)
                 .at[:B, :x.shape[1]].set(x.astype(jnp.bfloat16)))

        nd, n = self.node_features_dim, self.n_neighbors
        ne, efd, eg = self.nei_embedding_dim, self.edge_features_dim, self.edge_time_gaps_dim
        s0 = nd
        s1 = s0 + n * ne
        s2 = s1 + n * efd
        s3 = s2 + n * eg

        # per-column output scale row (fused into the kernel epilogue)
        scale_src = jnp.max(source_node_features) - jnp.min(source_node_features)
        scale_nei = jnp.max(neighbor_embeddings) - jnp.min(neighbor_embeddings)
        scale_edg = jnp.max(edge_features) - jnp.min(edge_features)
        scale_gap = jnp.max(edge_gaps) - jnp.min(edge_gaps)
        out_pad = params[-1][0].shape[1]
        scale_row = jnp.zeros((1, out_pad), jnp.float32)
        scale_row = scale_row.at[:, :s0].set(scale_src)
        scale_row = scale_row.at[:, s0:s1].set(scale_nei)
        scale_row = scale_row.at[:, s1:s2].set(scale_edg)
        scale_row = scale_row.at[:, s2:s3].set(scale_gap)

        final = mlp_forward(x_pad, scale_row, params, block_m=block_m)[:B, :self.out_dim]

        return (final[:, :s0],
                final[:, s0:s1].reshape(B, n, -1),
                final[:, s1:s2].reshape(B, n, -1),
                final[:, s2:s3].reshape(B, n))

    # ---- public API (mirrors the PyTorch module) ---------------------------
    def forward(self, source_node_features, timestamps_nodes, neighbor_embeddings,
                edge_features, edge_gaps, layer, before_embedding=None,
                noise_key=None):
        if noise_key is None:
            noise_key = jax.random.PRNGKey(42)
        return self._fwd[layer](source_node_features, timestamps_nodes,
                                neighbor_embeddings, edge_features, edge_gaps,
                                before_embedding, noise_key)


if __name__ == "__main__":
    key = jax.random.PRNGKey(0)
    (k_param, k_src, k_t, k_nei, k_ef, k_be, k_gap,
     k_noise0, k_noise1, k_chk, k_chk_big) = jax.random.split(key, 11)

    B, NF, NT, NN, NE, EF, EG = 8, 8, 1, 4, 8, 8, 1
    gen = Generator(node_features_dim=NF, edge_time_dim=NT, n_neighbors=NN,
                    nei_embedding_dim=NE, edge_features_dim=EF,
                    edge_time_gaps_dim=EG, batch_size=B, key=k_param)

    source_node_features = jax.random.normal(k_src, (B, NF), dtype=jnp.float32)
    timestamps_nodes = jax.random.normal(k_t, (B, NT), dtype=jnp.float32)
    neighbor_embeddings = jax.random.normal(k_nei, (B, NN * NE), dtype=jnp.float32)
    edge_features = jax.random.normal(k_ef, (B, NN * EF), dtype=jnp.float32)
    before_embedding = jax.random.normal(k_be, (B, NN * NE), dtype=jnp.float32)
    edge_gaps = jax.random.normal(k_gap, (B, NN * EG), dtype=jnp.float32)

    # layer 0 path (uses before_embedding)
    out0 = gen.forward(source_node_features, timestamps_nodes, neighbor_embeddings,
                       edge_features, edge_gaps, layer=0,
                       before_embedding=before_embedding, noise_key=k_noise0)
    # layer 1 path (no before_embedding)
    out1 = gen.forward(source_node_features, timestamps_nodes, neighbor_embeddings,
                       edge_features, edge_gaps, layer=1, noise_key=k_noise1)

    for o in list(out0) + list(out1):
        jax.block_until_ready(o)

    assert out0[0].shape == (B, NF)
    assert out0[1].shape == (B, NN, NE)
    assert out0[2].shape == (B, NN, EF)
    assert out0[3].shape == (B, NN)
    assert out1[0].shape == (B, NF)

    # kernel-vs-reference check, small-batch path (single tile, block_m=8)
    in_pad0 = gen.layer0_params[0][0].shape[0]
    out_pad0 = gen.layer0_params[-1][0].shape[1]
    scale_chk = jnp.zeros((1, out_pad0), jnp.float32).at[:, :gen.out_dim].set(1.7)

    bm = _choose_block_m(B)
    x_chk = jax.random.normal(k_chk, (B, 2 * gen.layer0_dim), dtype=jnp.float32) * 3.0
    x_chk_pad = (jnp.zeros((_round_up(B, bm), in_pad0), jnp.bfloat16)
                 .at[:B, :x_chk.shape[1]].set(x_chk.astype(jnp.bfloat16)))
    got = mlp_forward(x_chk_pad, scale_chk, gen.layer0_params, block_m=bm)[:B, :gen.out_dim]
    want = _ref_mlp(x_chk_pad, scale_chk, gen.layer0_params)[:B, :gen.out_dim]
    jax.block_until_ready(got)
    assert jnp.allclose(got, want, atol=5e-2), float(jnp.max(jnp.abs(got - want)))

    # kernel-vs-reference check, large-batch path (block_m=256, grid >= 2)
    B_big = 320
    bm_big = _choose_block_m(B_big)                    # 256
    B_big_pad = _round_up(B_big, bm_big)               # 512 -> grid of 2
    x_big = jax.random.normal(k_chk_big, (B_big, 2 * gen.layer0_dim), dtype=jnp.float32) * 3.0
    x_big_pad = (jnp.zeros((B_big_pad, in_pad0), jnp.bfloat16)
                 .at[:B_big, :x_big.shape[1]].set(x_big.astype(jnp.bfloat16)))
    got_b = mlp_forward(x_big_pad, scale_chk, gen.layer0_params,
                        block_m=bm_big)[:B_big, :gen.out_dim]
    want_b = _ref_mlp(x_big_pad, scale_chk, gen.layer0_params)[:B_big, :gen.out_dim]
    jax.block_until_ready(got_b)
    assert jnp.allclose(got_b, want_b, atol=5e-2), float(jnp.max(jnp.abs(got_b - want_b)))

    print("KERNEL_OK")
</pallas_src>

<mosaic_0001>
module attributes {stable_mosaic.version = 11 : i64} {
  func.func @_gen_mlp_kernel(%arg0: i32, %arg1: memref<8x256xbf16, #tpu.memory_space<vmem>>, %arg2: memref<1x128xf32, #tpu.memory_space<vmem>>, %arg3: memref<256x256xbf16, #tpu.memory_space<vmem>>, %arg4: memref<1x256xf32, #tpu.memory_space<vmem>>, %arg5: memref<256x128xbf16, #tpu.memory_space<vmem>>, %arg6: memref<1x128xf32, #tpu.memory_space<vmem>>, %arg7: memref<128x128xbf16, #tpu.memory_space<vmem>>, %arg8: memref<1x128xf32, #tpu.memory_space<vmem>>, %arg9: memref<128x256xbf16, #tpu.memory_space<vmem>>, %arg10: memref<1x256xf32, #tpu.memory_space<vmem>>, %arg11: memref<256x128xbf16, #tpu.memory_space<vmem>>, %arg12: memref<1x128xf32, #tpu.memory_space<vmem>>, %arg13: memref<8x128xf32, #tpu.memory_space<vmem>>) attributes {dimension_semantics = [#tpu.dimension_semantics<parallel>], iteration_bounds = array<i64: 1>, scalar_prefetch = 0 : i64, scratch_operands = 0 : i64, tpu.core_type = #tpu.core_type<tc>, window_params = [{transform_indices = @transform_0, window_bounds = array<i64: 8, 256>}, {pipeline_mode = #tpu.pipeline_mode<synchronous>, transform_indices = @transform_1, window_bounds = array<i64: 1, 128>}, {pipeline_mode = #tpu.pipeline_mode<synchronous>, transform_indices = @transform_2, window_bounds = array<i64: 256, 256>}, {pipeline_mode = #tpu.pipeline_mode<synchronous>, transform_indices = @transform_3, window_bounds = array<i64: 1, 256>}, {pipeline_mode = #tpu.pipeline_mode<synchronous>, transform_indices = @transform_4, window_bounds = array<i64: 256, 128>}, {pipeline_mode = #tpu.pipeline_mode<synchronous>, transform_indices = @transform_5, window_bounds = array<i64: 1, 128>}, {pipeline_mode = #tpu.pipeline_mode<synchronous>, transform_indices = @transform_6, window_bounds = array<i64: 128, 128>}, {pipeline_mode = #tpu.pipeline_mode<synchronous>, transform_indices = @transform_7, window_bounds = array<i64: 1, 128>}, {pipeline_mode = #tpu.pipeline_mode<synchronous>, transform_indices = @transform_8, window_bounds = array<i64: 128, 256>}, {pipeline_mode = #tpu.pipeline_mode<synchronous>, transform_indices = @transform_9, window_bounds = array<i64: 1, 256>}, {pipeline_mode = #tpu.pipeline_mode<synchronous>, transform_indices = @transform_10, window_bounds = array<i64: 256, 128>}, {pipeline_mode = #tpu.pipeline_mode<synchronous>, transform_indices = @transform_11, window_bounds = array<i64: 1, 128>}, {transform_indices = @transform_12, window_bounds = array<i64: 8, 128>}]} {
    %c0 = arith.constant 0 : index
    %c0_0 = arith.constant 0 : index
    %0 = vector.load %arg1[%c0, %c0_0] : memref<8x256xbf16, #tpu.memory_space<vmem>>, vector<8x256xbf16>
    %c0_1 = arith.constant 0 : index
    %c0_2 = arith.constant 0 : index
    %1 = vector.load %arg3[%c0_1, %c0_2] : memref<256x256xbf16, #tpu.memory_space<vmem>>, vector<256x256xbf16>
    %cst = arith.constant dense<0.000000e+00> : vector<8x256xf32>
    %2 = tpu.matmul %0, %1, %cst {dimension_numbers = #tpu.dot_dimension_numbers<[1], [0], [0], [1], [0, 0, 1, 1], [], []>} : vector<8x256xbf16>, vector<256x256xbf16>, vector<8x256xf32> -> vector<8x256xf32>
    %c0_3 = arith.constant 0 : index
    %c0_4 = arith.constant 0 : index
    %3 = vector.load %arg4[%c0_3, %c0_4] : memref<1x256xf32, #tpu.memory_space<vmem>>, vector<1x256xf32>
    %4 = vector.broadcast %3 : vector<1x256xf32> to vector<8x256xf32>
    %5 = arith.addf %2, %4 : vector<8x256xf32>
    %cst_5 = arith.constant 0.000000e+00 : f32
    %6 = vector.broadcast %cst_5 : f32 to vector<8x256xf32>
    %7 = arith.cmpf oge, %5, %6 : vector<8x256xf32>
    %cst_6 = arith.constant 2.000000e-01 : f32
    %8 = vector.broadcast %cst_6 : f32 to vector<8x256xf32>
    %9 = arith.mulf %8, %5 : vector<8x256xf32>
    %10 = arith.select %7, %5, %9 : vector<8x256xi1>, vector<8x256xf32>
    %11 = arith.truncf %10 : vector<8x256xf32> to vector<8x256xbf16>
    %c0_7 = arith.constant 0 : index
    %c0_8 = arith.constant 0 : index
    %12 = vector.load %arg5[%c0_7, %c0_8] : memref<256x128xbf16, #tpu.memory_space<vmem>>, vector<256x128xbf16>
    %cst_9 = arith.constant dense<0.000000e+00> : vector<8x128xf32>
    %13 = tpu.matmul %11, %12, %cst_9 {dimension_numbers = #tpu.dot_dimension_numbers<[1], [0], [0], [1], [0, 0, 1, 1], [], []>} : vector<8x256xbf16>, vector<256x128xbf16>, vector<8x128xf32> -> vector<8x128xf32>
    %c0_10 = arith.constant 0 : index
    %c0_11 = arith.constant 0 : index
    %14 = vector.load %arg6[%c0_10, %c0_11] : memref<1x128xf32, #tpu.memory_space<vmem>>, vector<1x128xf32>
    %15 = vector.broadcast %14 : vector<1x128xf32> to vector<8x128xf32>
    %16 = arith.addf %13, %15 : vector<8x128xf32>
    %cst_12 = arith.constant 0.000000e+00 : f32
    %17 = vector.broadcast %cst_12 : f32 to vector<8x128xf32>
    %18 = arith.cmpf oge, %16, %17 : vector<8x128xf32>
    %cst_13 = arith.constant 2.000000e-01 : f32
    %19 = vector.broadcast %cst_13 : f32 to vector<8x128xf32>
    %20 = arith.mulf %19, %16 : vector<8x128xf32>
    %21 = arith.select %18, %16, %20 : vector<8x128xi1>, vector<8x128xf32>
    %22 = arith.truncf %21 : vector<8x128xf32> to vector<8x128xbf16>
    %c0_14 = arith.constant 0 : index
    %c0_15 = arith.constant 0 : index
    %23 = vector.load %arg7[%c0_14, %c0_15] : memref<128x128xbf16, #tpu.memory_space<vmem>>, vector<128x128xbf16>
    %cst_16 = arith.constant dense<0.000000e+00> : vector<8x128xf32>
    %24 = tpu.matmul %22, %23, %cst_16 {dimension_numbers = #tpu.dot_dimension_numbers<[1], [0], [0], [1], [0, 0, 1, 1], [], []>} : vector<8x128xbf16>, vector<128x128xbf16>, vector<8x128xf32> -> vector<8x128xf32>
    %c0_17 = arith.constant 0 : index
    %c0_18 = arith.constant 0 : index
    %25 = vector.load %arg8[%c0_17, %c0_18] : memref<1x128xf32, #tpu.memory_space<vmem>>, vector<1x128xf32>
    %26 = vector.broadcast %25 : vector<1x128xf32> to vector<8x128xf32>
    %27 = arith.addf %24, %26 : vector<8x128xf32>
    %cst_19 = arith.constant 0.000000e+00 : f32
    %28 = vector.broadcast %cst_19 : f32 to vector<8x128xf32>
    %29 = arith.cmpf oge, %27, %28 : vector<8x128xf32>
    %cst_20 = arith.constant 2.000000e-01 : f32
    %30 = vector.broadcast %cst_20 : f32 to vector<8x128xf32>
    %31 = arith.mulf %30, %27 : vector<8x128xf32>
    %32 = arith.select %29, %27, %31 : vector<8x128xi1>, vector<8x128xf32>
    %33 = arith.truncf %32 : vector<8x128xf32> to vector<8x128xbf16>
    %c0_21 = arith.constant 0 : index
    %c0_22 = arith.constant 0 : index
    %34 = vector.load %arg9[%c0_21, %c0_22] : memref<128x256xbf16, #tpu.memory_space<vmem>>, vector<128x256xbf16>
    %cst_23 = arith.constant dense<0.000000e+00> : vector<8x256xf32>
    %35 = tpu.matmul %33, %34, %cst_23 {dimension_numbers = #tpu.dot_dimension_numbers<[1], [0], [0], [1], [0, 0, 1, 1], [], []>} : vector<8x128xbf16>, vector<128x256xbf16>, vector<8x256xf32> -> vector<8x256xf32>
    %c0_24 = arith.constant 0 : index
    %c0_25 = arith.constant 0 : index
    %36 = vector.load %arg10[%c0_24, %c0_25] : memref<1x256xf32, #tpu.memory_space<vmem>>, vector<1x256xf32>
    %37 = vector.broadcast %36 : vector<1x256xf32> to vector<8x256xf32>
    %38 = arith.addf %35, %37 : vector<8x256xf32>
    %cst_26 = arith.constant 0.000000e+00 : f32
    %39 = vector.broadcast %cst_26 : f32 to vector<8x256xf32>
    %40 = arith.cmpf oge, %38, %39 : vector<8x256xf32>
    %cst_27 = arith.constant 2.000000e-01 : f32
    %41 = vector.broadcast %cst_27 : f32 to vector<8x256xf32>
    %42 = arith.mulf %41, %38 : vector<8x256xf32>
    %43 = arith.select %40, %38, %42 : vector<8x256xi1>, vector<8x256xf32>
    %44 = arith.truncf %43 : vector<8x256xf32> to vector<8x256xbf16>
    %c0_28 = arith.constant 0 : index
    %c0_29 = arith.constant 0 : index
    %45 = vector.load %arg11[%c0_28, %c0_29] : memref<256x128xbf16, #tpu.memory_space<vmem>>, vector<256x128xbf16>
    %cst_30 = arith.constant dense<0.000000e+00> : vector<8x128xf32>
    %46 = tpu.matmul %44, %45, %cst_30 {dimension_numbers = #tpu.dot_dimension_numbers<[1], [0], [0], [1], [0, 0, 1, 1], [], []>} : vector<8x256xbf16>, vector<256x128xbf16>, vector<8x128xf32> -> vector<8x128xf32>
    %c0_31 = arith.constant 0 : index
    %c0_32 = arith.constant 0 : index
    %47 = vector.load %arg12[%c0_31, %c0_32] : memref<1x128xf32, #tpu.memory_space<vmem>>, vector<1x128xf32>
    %48 = vector.broadcast %47 : vector<1x128xf32> to vector<8x128xf32>
    %49 = arith.addf %46, %48 : vector<8x128xf32>
    %50 = math.tanh %49 : vector<8x128xf32>
    %cst_33 = arith.constant 5.000000e-01 : f32
    %51 = vector.broadcast %cst_33 : f32 to vector<8x128xf32>
    %52 = arith.mulf %50, %51 : vector<8x128xf32>
    %cst_34 = arith.constant 5.000000e-01 : f32
    %53 = vector.broadcast %cst_34 : f32 to vector<8x128xf32>
    %54 = arith.addf %52, %53 : vector<8x128xf32>
    %c0_35 = arith.constant 0 : index
    %c0_36 = arith.constant 0 : index
    %55 = vector.load %arg2[%c0_35, %c0_36] : memref<1x128xf32, #tpu.memory_space<vmem>>, vector<1x128xf32>
    %56 = vector.broadcast %55 : vector<1x128xf32> to vector<8x128xf32>
    %57 = arith.mulf %54, %56 : vector<8x128xf32>
    %c0_37 = arith.constant 0 : index
    %c0_38 = arith.constant 0 : index
    %58 = vector.load %arg13[%c0_37, %c0_38] : memref<8x128xf32, #tpu.memory_space<vmem>>, vector<8x128xf32>
    tpu.vector_store %arg13[%c0_37, %c0_38], %57 {strides = array<i32>} : memref<8x128xf32, #tpu.memory_space<vmem>>, vector<8x128xf32>,
    return
  }
  func.func @transform_0(%arg0: i32) -> (i32, i32) {
    %c0_i32 = arith.constant 0 : i32
    %c0_i32_0 = arith.constant 0 : i32
    return %arg0, %c0_i32 : i32, i32
  }
  func.func @transform_1(%arg0: i32) -> (i32, i32) {
    %c0_i32 = arith.constant 0 : i32
    %c0_i32_0 = arith.constant 0 : i32
    %c0_i32_1 = arith.constant 0 : i32
    return %c0_i32, %c0_i32_0 : i32, i32
  }
  func.func @transform_2(%arg0: i32) -> (i32, i32) {
    %c0_i32 = arith.constant 0 : i32
    %c0_i32_0 = arith.constant 0 : i32
    %c0_i32_1 = arith.constant 0 : i32
    return %c0_i32, %c0_i32_0 : i32, i32
  }
  func.func @transform_3(%arg0: i32) -> (i32, i32) {
    %c0_i32 = arith.constant 0 : i32
    %c0_i32_0 = arith.constant 0 : i32
    %c0_i32_1 = arith.constant 0 : i32
    return %c0_i32, %c0_i32_0 : i32, i32
  }
  func.func @transform_4(%arg0: i32) -> (i32, i32) {
    %c0_i32 = arith.constant 0 : i32
    %c0_i32_0 = arith.constant 0 : i32
    %c0_i32_1 = arith.constant 0 : i32
    return %c0_i32, %c0_i32_0 : i32, i32
  }
  func.func @transform_5(%arg0: i32) -> (i32, i32) {
    %c0_i32 = arith.constant 0 : i32
    %c0_i32_0 = arith.constant 0 : i32
    %c0_i32_1 = arith.constant 0 : i32
    return %c0_i32, %c0_i32_0 : i32, i32
  }
  func.func @transform_6(%arg0: i32) -> (i32, i32) {
    %c0_i32 = arith.constant 0 : i32
    %c0_i32_0 = arith.constant 0 : i32
    %c0_i32_1 = arith.constant 0 : i32
    return %c0_i32, %c0_i32_0 : i32, i32
  }
  func.func @transform_7(%arg0: i32) -> (i32, i32) {
    %c0_i32 = arith.constant 0 : i32
    %c0_i32_0 = arith.constant 0 : i32
    %c0_i32_1 = arith.constant 0 : i32
    return %c0_i32, %c0_i32_0 : i32, i32
  }
  func.func @transform_8(%arg0: i32) -> (i32, i32) {
    %c0_i32 = arith.constant 0 : i32
    %c0_i32_0 = arith.constant 0 : i32
    %c0_i32_1 = arith.constant 0 : i32
    return %c0_i32, %c0_i32_0 : i32, i32
  }
  func.func @transform_9(%arg0: i32) -> (i32, i32) {
    %c0_i32 = arith.constant 0 : i32
    %c0_i32_0 = arith.constant 0 : i32
    %c0_i32_1 = arith.constant 0 : i32
    return %c0_i32, %c0_i32_0 : i32, i32
  }
  func.func @transform_10(%arg0: i32) -> (i32, i32) {
    %c0_i32 = arith.constant 0 : i32
    %c0_i32_0 = arith.constant 0 : i32
    %c0_i32_1 = arith.constant 0 : i32
    return %c0_i32, %c0_i32_0 : i32, i32
  }
  func.func @transform_11(%arg0: i32) -> (i32, i32) {
    %c0_i32 = arith.constant 0 : i32
    %c0_i32_0 = arith.constant 0 : i32
    %c0_i32_1 = arith.constant 0 : i32
    return %c0_i32, %c0_i32_0 : i32, i32
  }
  func.func @transform_12(%arg0: i32) -> (i32, i32) {
    %c0_i32 = arith.constant 0 : i32
    %c0_i32_0 = arith.constant 0 : i32
    return %arg0, %c0_i32 : i32, i32
  }
}

</mosaic_0001>

<llo_original>
// kernel: _forward_impl.1
$region0: #{_forward_impl.1}
  #allocation0 [shape = 'u32[]', space=smem, size = 0x4, offset = 0x4, fixed_abs, tag = 'smem constant byte address 0x4 - core index']
  #allocation1 [shape = 'u32[144,128]{1,0:T(1,128)}', space=vmem, size = 0x12000, scoped, tag = 'internal scratch']
  %s0 = inlined_call_operand.vmem [shape: bf16[8,256], index: 0, kind: input, shape index: {}]
  %s1 = inlined_call_operand.vmem [shape: f32[1,128], index: 1, kind: input, shape index: {}]
  %s2 = inlined_call_operand.vmem [shape: bf16[256,256], index: 2, kind: input, shape index: {}]
  %s3 = inlined_call_operand.vmem [shape: f32[1,256], index: 3, kind: input, shape index: {}]
  %s4 = inlined_call_operand.vmem [shape: bf16[256,128], index: 4, kind: input, shape index: {}]
  %s5 = inlined_call_operand.vmem [shape: f32[1,128], index: 5, kind: input, shape index: {}]
  %s6 = inlined_call_operand.vmem [shape: bf16[128,128], index: 6, kind: input, shape index: {}]
  %s7 = inlined_call_operand.vmem [shape: f32[1,128], index: 7, kind: input, shape index: {}]
  %s8 = inlined_call_operand.vmem [shape: bf16[128,256], index: 8, kind: input, shape index: {}]
  %s9 = inlined_call_operand.vmem [shape: f32[1,256], index: 9, kind: input, shape index: {}]
  %s10 = inlined_call_operand.vmem [shape: bf16[256,128], index: 10, kind: input, shape index: {}]
  %s11 = inlined_call_operand.vmem [shape: f32[1,128], index: 11, kind: input, shape index: {}]
  %s12 = inlined_call_operand.vmem [shape: f32[8,128], index: 12, kind: output, shape index: {}]
  %s13 = sld [smem:[#allocation0]]
  $region58: #{_forward_impl.1} parent=0
    _
  %s15 = ssub.s32 1, %s13
  %s16 = scalar_select 0, %s15, %s13
  // Predicated region
  $region2: #{_forward_impl.1} parent=0 // pred_check
    _
  $region3: #{_forward_impl.1} parent=0 // pred_check_branch
    %18 = sbr.rel (0) target = $region5
  $region4: #{_forward_impl.1} parent=0 // pred_region
    _
  $region5: #{_forward_impl.1} parent=0 // pred_fallthru
    _
  // Predicated region
  $region6: #{_forward_impl.1} parent=0 // pred_check
    _
  $region7: #{_forward_impl.1} parent=0 // pred_check_branch
    %20 = sbr.rel (0) target = $region9
  $region8: #{_forward_impl.1} parent=0 // pred_region
    _
  $region9: #{_forward_impl.1} parent=0 // pred_fallthru
    _
  // Predicated region
  $region10: #{_forward_impl.1} parent=0 // pred_check
    _
  $region11: #{_forward_impl.1} parent=0 // pred_check_branch
    %22 = sbr.rel (0) target = $region13
  $region12: #{_forward_impl.1} parent=0 // pred_region
    _
  $region13: #{_forward_impl.1} parent=0 // pred_fallthru
    _
  // Predicated region
  $region14: #{_forward_impl.1} parent=0 // pred_check
    _
  $region15: #{_forward_impl.1} parent=0 // pred_check_branch
    %24 = sbr.rel (0) target = $region17
  $region16: #{_forward_impl.1} parent=0 // pred_region
    _
  $region17: #{_forward_impl.1} parent=0 // pred_fallthru
    _
  // Predicated region
  $region18: #{_forward_impl.1} parent=0 // pred_check
    _
  $region19: #{_forward_impl.1} parent=0 // pred_check_branch
    %26 = sbr.rel (0) target = $region21
  $region20: #{_forward_impl.1} parent=0 // pred_region
    _
  $region21: #{_forward_impl.1} parent=0 // pred_fallthru
    _
  // Predicated region
  $region22: #{_forward_impl.1} parent=0 // pred_check
    _
  $region23: #{_forward_impl.1} parent=0 // pred_check_branch
    %28 = sbr.rel (0) target = $region25
  $region24: #{_forward_impl.1} parent=0 // pred_region
    _
  $region25: #{_forward_impl.1} parent=0 // pred_fallthru
    _
  // Predicated region
  $region26: #{_forward_impl.1} parent=0 // pred_check
    _
  $region27: #{_forward_impl.1} parent=0 // pred_check_branch
    %30 = sbr.rel (0) target = $region29
  $region28: #{_forward_impl.1} parent=0 // pred_region
    _
  $region29: #{_forward_impl.1} parent=0 // pred_fallthru
    _
  // Predicated region
  $region30: #{_forward_impl.1} parent=0 // pred_check
    _
  $region31: #{_forward_impl.1} parent=0 // pred_check_branch
    %32 = sbr.rel (0) target = $region33
  $region32: #{_forward_impl.1} parent=0 // pred_region
    _
  $region33: #{_forward_impl.1} parent=0 // pred_fallthru
    _
  // Predicated region
  $region34: #{_forward_impl.1} parent=0 // pred_check
    _
  $region35: #{_forward_impl.1} parent=0 // pred_check_branch
    %34 = sbr.rel (0) target = $region37
  $region36: #{_forward_impl.1} parent=0 // pred_region
    _
  $region37: #{_forward_impl.1} parent=0 // pred_fallthru
    _
  // Predicated region
  $region38: #{_forward_impl.1} parent=0 // pred_check
    _
  $region39: #{_forward_impl.1} parent=0 // pred_check_branch
    %36 = sbr.rel (0) target = $region41
  $region40: #{_forward_impl.1} parent=0 // pred_region
    _
  $region41: #{_forward_impl.1} parent=0 // pred_fallthru
    _
  // Predicated region
  $region42: #{_forward_impl.1} parent=0 // pred_check
    _
  $region43: #{_forward_impl.1} parent=0 // pred_check_branch
    %38 = sbr.rel (0) target = $region45
  $region44: #{_forward_impl.1} parent=0 // pred_region
    _
  $region45: #{_forward_impl.1} parent=0 // pred_fallthru
    _
  // Predicated region
  $region46: #{_forward_impl.1} parent=0 // pred_check
    _
  $region47: #{_forward_impl.1} parent=0 // pred_check_branch
    %40 = sbr.rel (0) target = $region49
  $region48: #{_forward_impl.1} parent=0 // pred_region
    _
  $region49: #{_forward_impl.1} parent=0 // pred_fallthru
    _
  %v42 = vld [vmem:[%s0] sm:$0xff]
  %v43 = vld [vmem:[%s2] sm:$0xff]
  %v44 = vld [vmem:[%s2 + $0x8] sm:$0xff]
  %v45 = vld [vmem:[%s2 + $0x10] sm:$0xff]
  %v46 = vld [vmem:[%s2 + $0x18] sm:$0xff]
  %v47 = vld [vmem:[%s2 + $0x20] sm:$0xff]
  %v48 = vld [vmem:[%s2 + $0x28] sm:$0xff]
  %v49 = vld [vmem:[%s2 + $0x30] sm:$0xff]
  %v50 = vld [vmem:[%s2 + $0x38] sm:$0xff]
  %v51 = vld [vmem:[%s2 + $0x40] sm:$0xff]
  %v52 = vld [vmem:[%s2 + $0x48] sm:$0xff]
  %v53 = vld [vmem:[%s2 + $0x50] sm:$0xff]
  %v54 = vld [vmem:[%s2 + $0x58] sm:$0xff]
  %v55 = vld [vmem:[%s2 + $0x60] sm:$0xff]
  %v56 = vld [vmem:[%s2 + $0x68] sm:$0xff]
  %v57 = vld [vmem:[%s2 + $0x70] sm:$0xff]
  %v58 = vld [vmem:[%s2 + $0x78] sm:$0xff]
  %v59 = vld [vmem:[%s2 + $0x80] sm:$0xff]
  %v60 = vld [vmem:[%s2 + $0x88] sm:$0xff]
  %v61 = vld [vmem:[%s2 + $0x90] sm:$0xff]
  %v62 = vld [vmem:[%s2 + $0x98] sm:$0xff]
  %v63 = vld [vmem:[%s2 + $0xa0] sm:$0xff]
  %v64 = vld [vmem:[%s2 + $0xa8] sm:$0xff]
  %v65 = vld [vmem:[%s2 + $0xb0] sm:$0xff]
  %v66 = vld [vmem:[%s2 + $0xb8] sm:$0xff]
  %v67 = vld [vmem:[%s2 + $0xc0] sm:$0xff]
  %v68 = vld [vmem:[%s2 + $0xc8] sm:$0xff]
  %v69 = vld [vmem:[%s2 + $0xd0] sm:$0xff]
  %v70 = vld [vmem:[%s2 + $0xd8] sm:$0xff]
  %v71 = vld [vmem:[%s2 + $0xe0] sm:$0xff]
  %v72 = vld [vmem:[%s2 + $0xe8] sm:$0xff]
  %v73 = vld [vmem:[%s2 + $0xf0] sm:$0xff]
  %v74 = vld [vmem:[%s2 + $0xf8] sm:$0xff]
  %v75 = vld [vmem:[%s3] sm:$0x3]
  %v77 = vlaneseq
  %v78 = vshrl.u32 %v77, 7
  %v79 = vsub.s32 0, %v78
  %v80 = vrot.slane %v75, %v79
  %v81 = vlaneseq
  %v82 = vshrl.u32 %v81, 7
  %v83 = vsub.s32 1, %v82
  %v84 = vrot.slane %v75, %v83
  %v88 = vunpack.c.l.b16 %v42
  %v89 = vunpack.c.h.b16 %v42
  %v90 = vpack.c.b16 %v88, %v88
  %v91 = vpack.c.b16 %v89, %v89
  %v126 = vunpack.c.l.b16 %v43
  %v127 = vunpack.c.h.b16 %v43
  %v128 = vunpack.c.l.b16 %v44
  %v129 = vunpack.c.h.b16 %v44
  %v130 = vunpack.c.l.b16 %v45
  %v131 = vunpack.c.h.b16 %v45
  %v132 = vunpack.c.l.b16 %v46
  %v133 = vunpack.c.h.b16 %v46
  %v134 = vunpack.c.l.b16 %v47
  %v135 = vunpack.c.h.b16 %v47
  %v136 = vunpack.c.l.b16 %v48
  %v137 = vunpack.c.h.b16 %v48
  %v138 = vunpack.c.l.b16 %v49
  %v139 = vunpack.c.h.b16 %v49
  %v140 = vunpack.c.l.b16 %v50
  %v141 = vunpack.c.h.b16 %v50
  %v142 = vunpack.c.l.b16 %v51
  %v143 = vunpack.c.h.b16 %v51
  %v144 = vunpack.c.l.b16 %v52
  %v145 = vunpack.c.h.b16 %v52
  %v146 = vunpack.c.l.b16 %v53
  %v147 = vunpack.c.h.b16 %v53
  %v148 = vunpack.c.l.b16 %v54
  %v149 = vunpack.c.h.b16 %v54
  %v150 = vunpack.c.l.b16 %v55
  %v151 = vunpack.c.h.b16 %v55
  %v152 = vunpack.c.l.b16 %v56
  %v153 = vunpack.c.h.b16 %v56
  %v154 = vunpack.c.l.b16 %v57
  %v155 = vunpack.c.h.b16 %v57
  %v156 = vunpack.c.l.b16 %v58
  %v157 = vunpack.c.h.b16 %v58
  %v158 = vunpack.c.l.b16 %v59
  %v159 = vunpack.c.h.b16 %v59
  %v160 = vunpack.c.l.b16 %v60
  %v161 = vunpack.c.h.b16 %v60
  %v162 = vunpack.c.l.b16 %v61
  %v163 = vunpack.c.h.b16 %v61
  %v164 = vunpack.c.l.b16 %v62
  %v165 = vunpack.c.h.b16 %v62
  %v166 = vunpack.c.l.b16 %v63
  %v167 = vunpack.c.h.b16 %v63
  %v168 = vunpack.c.l.b16 %v64
  %v169 = vunpack.c.h.b16 %v64
  %v170 = vunpack.c.l.b16 %v65
  %v171 = vunpack.c.h.b16 %v65
  %v172 = vunpack.c.l.b16 %v66
  %v173 = vunpack.c.h.b16 %v66
  %v174 = vunpack.c.l.b16 %v67
  %v175 = vunpack.c.h.b16 %v67
  %v176 = vunpack.c.l.b16 %v68
  %v177 = vunpack.c.h.b16 %v68
  %v178 = vunpack.c.l.b16 %v69
  %v179 = vunpack.c.h.b16 %v69
  %v180 = vunpack.c.l.b16 %v70
  %v181 = vunpack.c.h.b16 %v70
  %v182 = vunpack.c.l.b16 %v71
  %v183 = vunpack.c.h.b16 %v71
  %v184 = vunpack.c.l.b16 %v72
  %v185 = vunpack.c.h.b16 %v72
  %v186 = vunpack.c.l.b16 %v73
  %v187 = vunpack.c.h.b16 %v73
  %v188 = vunpack.c.l.b16 %v74
  %v189 = vunpack.c.h.b16 %v74
  %v190 = vpack.c.b16 %v128, %v126
  %v191 = vpack.c.b16 %v129, %v127
  %v192 = vpack.c.b16 %v132, %v130
  %v193 = vpack.c.b16 %v133, %v131
  %v194 = vpack.c.b16 %v136, %v134
  %v195 = vpack.c.b16 %v137, %v135
  %v196 = vpack.c.b16 %v140, %v138
  %v197 = vpack.c.b16 %v141, %v139
  %v198 = vpack.c.b16 %v144, %v142
  %v199 = vpack.c.b16 %v145, %v143
  %v200 = vpack.c.b16 %v148, %v146
  %v201 = vpack.c.b16 %v149, %v147
  %v202 = vpack.c.b16 %v152, %v150
  %v203 = vpack.c.b16 %v153, %v151
  %v204 = vpack.c.b16 %v156, %v154
  %v205 = vpack.c.b16 %v157, %v155
  %v206 = vpack.c.b16 %v160, %v158
  %v207 = vpack.c.b16 %v161, %v159
  %v208 = vpack.c.b16 %v164, %v162
  %v209 = vpack.c.b16 %v165, %v163
  %v210 = vpack.c.b16 %v168, %v166
  %v211 = vpack.c.b16 %v169, %v167
  %v212 = vpack.c.b16 %v172, %v170
  %v213 = vpack.c.b16 %v173, %v171
  %v214 = vpack.c.b16 %v176, %v174
  %v215 = vpack.c.b16 %v177, %v175
  %v216 = vpack.c.b16 %v180, %v178
  %v217 = vpack.c.b16 %v181, %v179
  %v218 = vpack.c.b16 %v184, %v182
  %v219 = vpack.c.b16 %v185, %v183
  %v220 = vpack.c.b16 %v188, %v186
  %v221 = vpack.c.b16 %v189, %v187
  %254 = vmatprep.subr.bf16.mxu0 %v191
  %255 = vmatpush1.bf16.msra.mxu0 %v190
  %256 = vmatprep.subr.bf16.mxu0 %v193
  %257 = vmatpush1.bf16.msra.mxu0 %v192
  %258 = vmatprep.subr.bf16.mxu0 %v195
  %259 = vmatpush1.bf16.msra.mxu0 %v194
  %260 = vmatprep.subr.bf16.mxu0 %v197
  %261 = vmatpush1.bf16.msra.mxu0 %v196
  %262 = vmatprep.subr.bf16.mxu0 %v199
  %263 = vmatpush1.bf16.msra.mxu0 %v198
  %264 = vmatprep.subr.bf16.mxu0 %v201
  %265 = vmatpush1.bf16.msra.mxu0 %v200
  %266 = vmatprep.subr.bf16.mxu0 %v203
  %267 = vmatpush1.bf16.msra.mxu0 %v202
  %268 = vmatprep.subr.bf16.mxu0 %v205
  %269 = vmatpush1.bf16.msra.mxu0 %v204
  %270 = vmatprep.subr.bf16.mxu0 %v207
  %271 = vmatpush1.bf16.msra.mxu0 %v206
  %272 = vmatprep.subr.bf16.mxu0 %v209
  %273 = vmatpush1.bf16.msra.mxu0 %v208
  %274 = vmatprep.subr.bf16.mxu0 %v211
  %275 = vmatpush1.bf16.msra.mxu0 %v210
  %276 = vmatprep.subr.bf16.mxu0 %v213
  %277 = vmatpush1.bf16.msra.mxu0 %v212
  %278 = vmatprep.subr.bf16.mxu0 %v215
  %279 = vmatpush1.bf16.msra.mxu0 %v214
  %280 = vmatprep.subr.bf16.mxu0 %v217
  %281 = vmatpush1.bf16.msra.mxu0 %v216
  %282 = vmatprep.subr.bf16.mxu0 %v219
  %283 = vmatpush1.bf16.msra.mxu0 %v218
  %284 = vmatprep.subr.bf16.mxu0 %v221
  %285 = vmatpush1.bf16.msra.mxu0 %v220
  %286 = vmatprep.mubr.bf16.mxu0 %v91
  %287 = vmatmul.mubr.bf16.gmra.mrb[0].mxu0 %v90
  %v288 = vpop.f32.mrb[0].mxu0
  %v289 = vadd.f32 %v80, %v288
  %v290 = vpop.f32.mrb[0].mxu0
  %v291 = vadd.f32 %v84, %v290
  %v292 = vpop.f32.mrb[0].mxu0
  %v293 = vpop.f32.mrb[0].mxu0
  %294 = vdwg.mxu0
  %vm295 = vcmp.ge.f32.partialorder %v289, 0.0
  %vm296 = vcmp.ge.f32.partialorder %v291, 0.0
  %v297 = vmul.f32 %v289, 0.2
  %v298 = vmul.f32 %v291, 0.2
  %v299 = vsel %vm295, %v289, %v297
  %v300 = vsel %vm296, %v291, %v298
  %v301 = vpack.c.bf16 %v299, %v299
  %v302 = vpack.c.bf16 %v300, %v300
  %v303 = vld [vmem:[%s4] sm:$0xf]
  %v304 = vld [vmem:[%s4 + $0x4] sm:$0xf]
  %v305 = vld [vmem:[%s4 + $0x8] sm:$0xf]
  %v306 = vld [vmem:[%s4 + $0xc] sm:$0xf]
  %v307 = vld [vmem:[%s4 + $0x10] sm:$0xf]
  %v308 = vld [vmem:[%s4 + $0x14] sm:$0xf]
  %v309 = vld [vmem:[%s4 + $0x18] sm:$0xf]
  %v310 = vld [vmem:[%s4 + $0x1c] sm:$0xf]
  %v311 = vld [vmem:[%s4 + $0x20] sm:$0xf]
  %v312 = vld [vmem:[%s4 + $0x24] sm:$0xf]
  %v313 = vld [vmem:[%s4 + $0x28] sm:$0xf]
  %v314 = vld [vmem:[%s4 + $0x2c] sm:$0xf]
  %v315 = vld [vmem:[%s4 + $0x30] sm:$0xf]
  %v316 = vld [vmem:[%s4 + $0x34] sm:$0xf]
  %v317 = vld [vmem:[%s4 + $0x38] sm:$0xf]
  %v318 = vld [vmem:[%s4 + $0x3c] sm:$0xf]
  %v319 = vld [vmem:[%s4 + $0x40] sm:$0xf]
  %v320 = vld [vmem:[%s4 + $0x44] sm:$0xf]
  %v321 = vld [vmem:[%s4 + $0x48] sm:$0xf]
  %v322 = vld [vmem:[%s4 + $0x4c] sm:$0xf]
  %v323 = vld [vmem:[%s4 + $0x50] sm:$0xf]
  %v324 = vld [vmem:[%s4 + $0x54] sm:$0xf]
  %v325 = vld [vmem:[%s4 + $0x58] sm:$0xf]
  %v326 = vld [vmem:[%s4 + $0x5c] sm:$0xf]
  %v327 = vld [vmem:[%s4 + $0x60] sm:$0xf]
  %v328 = vld [vmem:[%s4 + $0x64] sm:$0xf]
  %v329 = vld [vmem:[%s4 + $0x68] sm:$0xf]
  %v330 = vld [vmem:[%s4 + $0x6c] sm:$0xf]
  %v331 = vld [vmem:[%s4 + $0x70] sm:$0xf]
  %v332 = vld [vmem:[%s4 + $0x74] sm:$0xf]
  %v333 = vld [vmem:[%s4 + $0x78] sm:$0xf]
  %v334 = vld [vmem:[%s4 + $0x7c] sm:$0xf]
  %v335 = vld [vmem:[%s5] sm:$0x1]
  %v337 = vlaneseq
  %v338 = vshrl.u32 %v337, 7
  %v339 = vsub.s32 0, %v338
  %v340 = vrot.slane %v335, %v339
  %v374 = vunpack.c.l.b16 %v303
  %v375 = vunpack.c.l.b16 %v304
  %v376 = vunpack.c.l.b16 %v305
  %v377 = vunpack.c.l.b16 %v306
  %v378 = vunpack.c.l.b16 %v307
  %v379 = vunpack.c.l.b16 %v308
  %v380 = vunpack.c.l.b16 %v309
  %v381 = vunpack.c.l.b16 %v310
  %v382 = vunpack.c.l.b16 %v311
  %v383 = vunpack.c.l.b16 %v312
  %v384 = vunpack.c.l.b16 %v313
  %v385 = vunpack.c.l.b16 %v314
  %v386 = vunpack.c.l.b16 %v315
  %v387 = vunpack.c.l.b16 %v316
  %v388 = vunpack.c.l.b16 %v317
  %v389 = vunpack.c.l.b16 %v318
  %v390 = vunpack.c.l.b16 %v319
  %v391 = vunpack.c.l.b16 %v320
  %v392 = vunpack.c.l.b16 %v321
  %v393 = vunpack.c.l.b16 %v322
  %v394 = vunpack.c.l.b16 %v323
  %v395 = vunpack.c.l.b16 %v324
  %v396 = vunpack.c.l.b16 %v325
  %v397 = vunpack.c.l.b16 %v326
  %v398 = vunpack.c.l.b16 %v327
  %v399 = vunpack.c.l.b16 %v328
  %v400 = vunpack.c.l.b16 %v329
  %v401 = vunpack.c.l.b16 %v330
  %v402 = vunpack.c.l.b16 %v331
  %v403 = vunpack.c.l.b16 %v332
  %v404 = vunpack.c.l.b16 %v333
  %v405 = vunpack.c.l.b16 %v334
  %v406 = vpack.c.b16 %v375, %v374
  %v407 = vpack.c.b16 %v377, %v376
  %v408 = vpack.c.b16 %v379, %v378
  %v409 = vpack.c.b16 %v381, %v380
  %v410 = vpack.c.b16 %v383, %v382
  %v411 = vpack.c.b16 %v385, %v384
  %v412 = vpack.c.b16 %v387, %v386
  %v413 = vpack.c.b16 %v389, %v388
  %v414 = vpack.c.b16 %v391, %v390
  %v415 = vpack.c.b16 %v393, %v392
  %v416 = vpack.c.b16 %v395, %v394
  %v417 = vpack.c.b16 %v397, %v396
  %v418 = vpack.c.b16 %v399, %v398
  %v419 = vpack.c.b16 %v401, %v400
  %v420 = vpack.c.b16 %v403, %v402
  %v421 = vpack.c.b16 %v405, %v404
  %438 = vmatprep.subr.bf16.mxu0 0
  %439 = vmatpush1.bf16.msra.mxu0 %v406
  %440 = vmatprep.subr.bf16.mxu0 0
  %441 = vmatpush1.bf16.msra.mxu0 %v407
  %442 = vmatprep.subr.bf16.mxu0 0
  %443 = vmatpush1.bf16.msra.mxu0 %v408
  %444 = vmatprep.subr.bf16.mxu0 0
  %445 = vmatpush1.bf16.msra.mxu0 %v409
  %446 = vmatprep.subr.bf16.mxu0 0
  %447 = vmatpush1.bf16.msra.mxu0 %v410
  %448 = vmatprep.subr.bf16.mxu0 0
  %449 = vmatpush1.bf16.msra.mxu0 %v411
  %450 = vmatprep.subr.bf16.mxu0 0
  %451 = vmatpush1.bf16.msra.mxu0 %v412
  %452 = vmatprep.subr.bf16.mxu0 0
  %453 = vmatpush1.bf16.msra.mxu0 %v413
  %454 = vmatprep.subr.bf16.mxu0 0
  %455 = vmatpush1.bf16.msra.mxu0 %v414
  %456 = vmatprep.subr.bf16.mxu0 0
  %457 = vmatpush1.bf16.msra.mxu0 %v415
  %458 = vmatprep.subr.bf16.mxu0 0
  %459 = vmatpush1.bf16.msra.mxu0 %v416
  %460 = vmatprep.subr.bf16.mxu0 0
  %461 = vmatpush1.bf16.msra.mxu0 %v417
  %462 = vmatprep.subr.bf16.mxu0 0
  %463 = vmatpush1.bf16.msra.mxu0 %v418
  %464 = vmatprep.subr.bf16.mxu0 0
  %465 = vmatpush1.bf16.msra.mxu0 %v419
  %466 = vmatprep.subr.bf16.mxu0 0
  %467 = vmatpush1.bf16.msra.mxu0 %v420
  %468 = vmatprep.subr.bf16.mxu0 0
  %469 = vmatpush1.bf16.msra.mxu0 %v421
  %470 = vmatprep.mubr.bf16.mxu0 %v302
  %471 = vmatmul.mubr.bf16.gmra.mrb[0].mxu0 %v301
  %v472 = vpop.f32.mrb[0].mxu0
  %v473 = vadd.f32 %v340, %v472
  %v474 = vpop.f32.mrb[0].mxu0
  %v475 = vpop.f32.mrb[0].mxu0
  %v476 = vpop.f32.mrb[0].mxu0
  %477 = vdwg.mxu0
  %vm478 = vcmp.ge.f32.partialorder %v473, 0.0
  %v479 = vmul.f32 %v473, 0.2
  %v480 = vsel %vm478, %v473, %v479
  %v481 = vpack.c.bf16 %v480, %v480
  %v482 = vld [vmem:[%s6] sm:$0xf]
  %v483 = vld [vmem:[%s6 + $0x4] sm:$0xf]
  %v484 = vld [vmem:[%s6 + $0x8] sm:$0xf]
  %v485 = vld [vmem:[%s6 + $0xc] sm:$0xf]
  %v486 = vld [vmem:[%s6 + $0x10] sm:$0xf]
  %v487 = vld [vmem:[%s6 + $0x14] sm:$0xf]
  %v488 = vld [vmem:[%s6 + $0x18] sm:$0xf]
  %v489 = vld [vmem:[%s6 + $0x1c] sm:$0xf]
  %v490 = vld [vmem:[%s6 + $0x20] sm:$0xf]
  %v491 = vld [vmem:[%s6 + $0x24] sm:$0xf]
  %v492 = vld [vmem:[%s6 + $0x28] sm:$0xf]
  %v493 = vld [vmem:[%s6 + $0x2c] sm:$0xf]
  %v494 = vld [vmem:[%s6 + $0x30] sm:$0xf]
  %v495 = vld [vmem:[%s6 + $0x34] sm:$0xf]
  %v496 = vld [vmem:[%s6 + $0x38] sm:$0xf]
  %v497 = vld [vmem:[%s6 + $0x3c] sm:$0xf]
  %v498 = vld [vmem:[%s7] sm:$0x1]
  %v500 = vlaneseq
  %v501 = vshrl.u32 %v500, 7
  %v502 = vsub.s32 0, %v501
  %v503 = vrot.slane %v498, %v502
  %v521 = vunpack.c.l.b16 %v482
  %v522 = vunpack.c.l.b16 %v483
  %v523 = vunpack.c.l.b16 %v484
  %v524 = vunpack.c.l.b16 %v485
  %v525 = vunpack.c.l.b16 %v486
  %v526 = vunpack.c.l.b16 %v487
  %v527 = vunpack.c.l.b16 %v488
  %v528 = vunpack.c.l.b16 %v489
  %v529 = vunpack.c.l.b16 %v490
  %v530 = vunpack.c.l.b16 %v491
  %v531 = vunpack.c.l.b16 %v492
  %v532 = vunpack.c.l.b16 %v493
  %v533 = vunpack.c.l.b16 %v494
  %v534 = vunpack.c.l.b16 %v495
  %v535 = vunpack.c.l.b16 %v496
  %v536 = vunpack.c.l.b16 %v497
  %v537 = vpack.c.b16 %v522, %v521
  %v538 = vpack.c.b16 %v524, %v523
  %v539 = vpack.c.b16 %v526, %v525
  %v540 = vpack.c.b16 %v528, %v527
  %v541 = vpack.c.b16 %v530, %v529
  %v542 = vpack.c.b16 %v532, %v531
  %v543 = vpack.c.b16 %v534, %v533
  %v544 = vpack.c.b16 %v536, %v535
  %553 = vmatprep.subr.bf16.mxu0 0
  %554 = vmatpush1.bf16.msra.mxu0 %v537
  %555 = vmatprep.subr.bf16.mxu0 0
  %556 = vmatpush1.bf16.msra.mxu0 %v538
  %557 = vmatprep.subr.bf16.mxu0 0
  %558 = vmatpush1.bf16.msra.mxu0 %v539
  %559 = vmatprep.subr.bf16.mxu0 0
  %560 = vmatpush1.bf16.msra.mxu0 %v540
  %561 = vmatprep.subr.bf16.mxu0 0
  %562 = vmatpush1.bf16.msra.mxu0 %v541
  %563 = vmatprep.subr.bf16.mxu0 0
  %564 = vmatpush1.bf16.msra.mxu0 %v542
  %565 = vmatprep.subr.bf16.mxu0 0
  %566 = vmatpush1.bf16.msra.mxu0 %v543
  %567 = vmatprep.subr.bf16.mxu0 0
  %568 = vmatpush1.bf16.msra.mxu0 %v544
  %569 = vmatprep.subr.bf16.mxu0 0
  %570 = vmatpush1.bf16.msra.mxu0 0
  %571 = vmatprep.subr.bf16.mxu0 0
  %572 = vmatpush1.bf16.msra.mxu0 0
  %573 = vmatprep.subr.bf16.mxu0 0
  %574 = vmatpush1.bf16.msra.mxu0 0
  %575 = vmatprep.subr.bf16.mxu0 0
  %576 = vmatpush1.bf16.msra.mxu0 0
  %577 = vmatprep.subr.bf16.mxu0 0
  %578 = vmatpush1.bf16.msra.mxu0 0
  %579 = vmatprep.subr.bf16.mxu0 0
  %580 = vmatpush1.bf16.msra.mxu0 0
  %581 = vmatprep.subr.bf16.mxu0 0
  %582 = vmatpush1.bf16.msra.mxu0 0
  %583 = vmatprep.subr.bf16.mxu0 0
  %584 = vmatpush1.bf16.msra.mxu0 0
  %585 = vmatprep.mubr.bf16.mxu0 0
  %586 = vmatmul.mubr.bf16.gmra.mrb[0].mxu0 %v481
  %v587 = vpop.f32.mrb[0].mxu0
  %v588 = vadd.f32 %v503, %v587
  %v589 = vpop.f32.mrb[0].mxu0
  %v590 = vpop.f32.mrb[0].mxu0
  %v591 = vpop.f32.mrb[0].mxu0
  %592 = vdwg.mxu0
  %vm593 = vcmp.ge.f32.partialorder %v588, 0.0
  %v594 = vmul.f32 %v588, 0.2
  %v595 = vsel %vm593, %v588, %v594
  %v596 = vpack.c.bf16 %v595, %v595
  %v597 = vld [vmem:[%s8] sm:$0xff]
  %v598 = vld [vmem:[%s8 + $0x8] sm:$0xff]
  %v599 = vld [vmem:[%s8 + $0x10] sm:$0xff]
  %v600 = vld [vmem:[%s8 + $0x18] sm:$0xff]
  %v601 = vld [vmem:[%s8 + $0x20] sm:$0xff]
  %v602 = vld [vmem:[%s8 + $0x28] sm:$0xff]
  %v603 = vld [vmem:[%s8 + $0x30] sm:$0xff]
  %v604 = vld [vmem:[%s8 + $0x38] sm:$0xff]
  %v605 = vld [vmem:[%s8 + $0x40] sm:$0xff]
  %v606 = vld [vmem:[%s8 + $0x48] sm:$0xff]
  %v607 = vld [vmem:[%s8 + $0x50] sm:$0xff]
  %v608 = vld [vmem:[%s8 + $0x58] sm:$0xff]
  %v609 = vld [vmem:[%s8 + $0x60] sm:$0xff]
  %v610 = vld [vmem:[%s8 + $0x68] sm:$0xff]
  %v611 = vld [vmem:[%s8 + $0x70] sm:$0xff]
  %v612 = vld [vmem:[%s8 + $0x78] sm:$0xff]
  %v613 = vld [vmem:[%s9] sm:$0x3]
  %v615 = vlaneseq
  %v616 = vshrl.u32 %v615, 7
  %v617 = vsub.s32 0, %v616
  %v618 = vrot.slane %v613, %v617
  %v619 = vlaneseq
  %v620 = vshrl.u32 %v619, 7
  %v621 = vsub.s32 1, %v620
  %v622 = vrot.slane %v613, %v621
  %v641 = vunpack.c.l.b16 %v597
  %v642 = vunpack.c.h.b16 %v597
  %v643 = vunpack.c.l.b16 %v598
  %v644 = vunpack.c.h.b16 %v598
  %v645 = vunpack.c.l.b16 %v599
  %v646 = vunpack.c.h.b16 %v599
  %v647 = vunpack.c.l.b16 %v600
  %v648 = vunpack.c.h.b16 %v600
  %v649 = vunpack.c.l.b16 %v601
  %v650 = vunpack.c.h.b16 %v601
  %v651 = vunpack.c.l.b16 %v602
  %v652 = vunpack.c.h.b16 %v602
  %v653 = vunpack.c.l.b16 %v603
  %v654 = vunpack.c.h.b16 %v603
  %v655 = vunpack.c.l.b16 %v604
  %v656 = vunpack.c.h.b16 %v604
  %v657 = vunpack.c.l.b16 %v605
  %v658 = vunpack.c.h.b16 %v605
  %v659 = vunpack.c.l.b16 %v606
  %v660 = vunpack.c.h.b16 %v606
  %v661 = vunpack.c.l.b16 %v607
  %v662 = vunpack.c.h.b16 %v607
  %v663 = vunpack.c.l.b16 %v608
  %v664 = vunpack.c.h.b16 %v608
  %v665 = vunpack.c.l.b16 %v609
  %v666 = vunpack.c.h.b16 %v609
  %v667 = vunpack.c.l.b16 %v610
  %v668 = vunpack.c.h.b16 %v610
  %v669 = vunpack.c.l.b16 %v611
  %v670 = vunpack.c.h.b16 %v611
  %v671 = vunpack.c.l.b16 %v612
  %v672 = vunpack.c.h.b16 %v612
  %v673 = vpack.c.b16 %v643, %v641
  %v674 = vpack.c.b16 %v644, %v642
  %v675 = vpack.c.b16 %v647, %v645
  %v676 = vpack.c.b16 %v648, %v646
  %v677 = vpack.c.b16 %v651, %v649
  %v678 = vpack.c.b16 %v652, %v650
  %v679 = vpack.c.b16 %v655, %v653
  %v680 = vpack.c.b16 %v656, %v654
  %v681 = vpack.c.b16 %v659, %v657
  %v682 = vpack.c.b16 %v660, %v658
  %v683 = vpack.c.b16 %v663, %v661
  %v684 = vpack.c.b16 %v664, %v662
  %v685 = vpack.c.b16 %v667, %v665
  %v686 = vpack.c.b16 %v668, %v666
  %v687 = vpack.c.b16 %v671, %v669
  %v688 = vpack.c.b16 %v672, %v670
  %705 = vmatprep.subr.bf16.mxu0 %v674
  %706 = vmatpush1.bf16.msra.mxu0 %v673
  %707 = vmatprep.subr.bf16.mxu0 %v676
  %708 = vmatpush1.bf16.msra.mxu0 %v675
  %709 = vmatprep.subr.bf16.mxu0 %v678
  %710 = vmatpush1.bf16.msra.mxu0 %v677
  %711 = vmatprep.subr.bf16.mxu0 %v680
  %712 = vmatpush1.bf16.msra.mxu0 %v679
  %713 = vmatprep.subr.bf16.mxu0 %v682
  %714 = vmatpush1.bf16.msra.mxu0 %v681
  %715 = vmatprep.subr.bf16.mxu0 %v684
  %716 = vmatpush1.bf16.msra.mxu0 %v683
  %717 = vmatprep.subr.bf16.mxu0 %v686
  %718 = vmatpush1.bf16.msra.mxu0 %v685
  %719 = vmatprep.subr.bf16.mxu0 %v688
  %720 = vmatpush1.bf16.msra.mxu0 %v687
  %721 = vmatprep.subr.bf16.mxu0 0
  %722 = vmatpush1.bf16.msra.mxu0 0
  %723 = vmatprep.subr.bf16.mxu0 0
  %724 = vmatpush1.bf16.msra.mxu0 0
  %725 = vmatprep.subr.bf16.mxu0 0
  %726 = vmatpush1.bf16.msra.mxu0 0
  %727 = vmatprep.subr.bf16.mxu0 0
  %728 = vmatpush1.bf16.msra.mxu0 0
  %729 = vmatprep.subr.bf16.mxu0 0
  %730 = vmatpush1.bf16.msra.mxu0 0
  %731 = vmatprep.subr.bf16.mxu0 0
  %732 = vmatpush1.bf16.msra.mxu0 0
  %733 = vmatprep.subr.bf16.mxu0 0
  %734 = vmatpush1.bf16.msra.mxu0 0
  %735 = vmatprep.subr.bf16.mxu0 0
  %736 = vmatpush1.bf16.msra.mxu0 0
  %737 = vmatprep.mubr.bf16.mxu0 0
  %738 = vmatmul.mubr.bf16.gmra.mrb[0].mxu0 %v596
  %v739 = vpop.f32.mrb[0].mxu0
  %v740 = vadd.f32 %v618, %v739
  %v741 = vpop.f32.mrb[0].mxu0
  %v742 = vadd.f32 %v622, %v741
  %v743 = vpop.f32.mrb[0].mxu0
  %v744 = vpop.f32.mrb[0].mxu0
  %745 = vdwg.mxu0
  %vm746 = vcmp.ge.f32.partialorder %v740, 0.0
  %vm747 = vcmp.ge.f32.partialorder %v742, 0.0
  %v748 = vmul.f32 %v740, 0.2
  %v749 = vmul.f32 %v742, 0.2
  %v750 = vsel %vm746, %v740, %v748
  %v751 = vsel %vm747, %v742, %v749
  %v752 = vpack.c.bf16 %v750, %v750
  %v753 = vpack.c.bf16 %v751, %v751
  %v754 = vld [vmem:[%s10] sm:$0xf]
  %v755 = vld [vmem:[%s10 + $0x4] sm:$0xf]
  %v756 = vld [vmem:[%s10 + $0x8] sm:$0xf]
  %v757 = vld [vmem:[%s10 + $0xc] sm:$0xf]
  %v758 = vld [vmem:[%s10 + $0x10] sm:$0xf]
  %v759 = vld [vmem:[%s10 + $0x14] sm:$0xf]
  %v760 = vld [vmem:[%s10 + $0x18] sm:$0xf]
  %v761 = vld [vmem:[%s10 + $0x1c] sm:$0xf]
  %v762 = vld [vmem:[%s10 + $0x20] sm:$0xf]
  %v763 = vld [vmem:[%s10 + $0x24] sm:$0xf]
  %v764 = vld [vmem:[%s10 + $0x28] sm:$0xf]
  %v765 = vld [vmem:[%s10 + $0x2c] sm:$0xf]
  %v766 = vld [vmem:[%s10 + $0x30] sm:$0xf]
  %v767 = vld [vmem:[%s10 + $0x34] sm:$0xf]
  %v768 = vld [vmem:[%s10 + $0x38] sm:$0xf]
  %v769 = vld [vmem:[%s10 + $0x3c] sm:$0xf]
  %v770 = vld [vmem:[%s10 + $0x40] sm:$0xf]
  %v771 = vld [vmem:[%s10 + $0x44] sm:$0xf]
  %v772 = vld [vmem:[%s10 + $0x48] sm:$0xf]
  %v773 = vld [vmem:[%s10 + $0x4c] sm:$0xf]
  %v774 = vld [vmem:[%s10 + $0x50] sm:$0xf]
  %v775 = vld [vmem:[%s10 + $0x54] sm:$0xf]
  %v776 = vld [vmem:[%s10 + $0x58] sm:$0xf]
  %v777 = vld [vmem:[%s10 + $0x5c] sm:$0xf]
  %v778 = vld [vmem:[%s10 + $0x60] sm:$0xf]
  %v779 = vld [vmem:[%s10 + $0x64] sm:$0xf]
  %v780 = vld [vmem:[%s10 + $0x68] sm:$0xf]
  %v781 = vld [vmem:[%s10 + $0x6c] sm:$0xf]
  %v782 = vld [vmem:[%s10 + $0x70] sm:$0xf]
  %v783 = vld [vmem:[%s10 + $0x74] sm:$0xf]
  %v784 = vld [vmem:[%s10 + $0x78] sm:$0xf]
  %v785 = vld [vmem:[%s10 + $0x7c] sm:$0xf]
  %v786 = vld [vmem:[%s11] sm:$0x1]
  %v788 = vlaneseq
  %v789 = vshrl.u32 %v788, 7
  %v790 = vsub.s32 0, %v789
  %v791 = vrot.slane %v786, %v790
  %v825 = vunpack.c.l.b16 %v754
  %v826 = vunpack.c.l.b16 %v755
  %v827 = vunpack.c.l.b16 %v756
  %v828 = vunpack.c.l.b16 %v757
  %v829 = vunpack.c.l.b16 %v758
  %v830 = vunpack.c.l.b16 %v759
  %v831 = vunpack.c.l.b16 %v760
  %v832 = vunpack.c.l.b16 %v761
  %v833 = vunpack.c.l.b16 %v762
  %v834 = vunpack.c.l.b16 %v763
  %v835 = vunpack.c.l.b16 %v764
  %v836 = vunpack.c.l.b16 %v765
  %v837 = vunpack.c.l.b16 %v766
  %v838 = vunpack.c.l.b16 %v767
  %v839 = vunpack.c.l.b16 %v768
  %v840 = vunpack.c.l.b16 %v769
  %v841 = vunpack.c.l.b16 %v770
  %v842 = vunpack.c.l.b16 %v771
  %v843 = vunpack.c.l.b16 %v772
  %v844 = vunpack.c.l.b16 %v773
  %v845 = vunpack.c.l.b16 %v774
  %v846 = vunpack.c.l.b16 %v775
  %v847 = vunpack.c.l.b16 %v776
  %v848 = vunpack.c.l.b16 %v777
  %v849 = vunpack.c.l.b16 %v778
  %v850 = vunpack.c.l.b16 %v779
  %v851 = vunpack.c.l.b16 %v780
  %v852 = vunpack.c.l.b16 %v781
  %v853 = vunpack.c.l.b16 %v782
  %v854 = vunpack.c.l.b16 %v783
  %v855 = vunpack.c.l.b16 %v784
  %v856 = vunpack.c.l.b16 %v785
  %v857 = vpack.c.b16 %v826, %v825
  %v858 = vpack.c.b16 %v828, %v827
  %v859 = vpack.c.b16 %v830, %v829
  %v860 = vpack.c.b16 %v832, %v831
  %v861 = vpack.c.b16 %v834, %v833
  %v862 = vpack.c.b16 %v836, %v835
  %v863 = vpack.c.b16 %v838, %v837
  %v864 = vpack.c.b16 %v840, %v839
  %v865 = vpack.c.b16 %v842, %v841
  %v866 = vpack.c.b16 %v844, %v843
  %v867 = vpack.c.b16 %v846, %v845
  %v868 = vpack.c.b16 %v848, %v847
  %v869 = vpack.c.b16 %v850, %v849
  %v870 = vpack.c.b16 %v852, %v851
  %v871 = vpack.c.b16 %v854, %v853
  %v872 = vpack.c.b16 %v856, %v855
  %889 = vmatprep.subr.bf16.mxu0 0
  %890 = vmatpush1.bf16.msra.mxu0 %v857
  %891 = vmatprep.subr.bf16.mxu0 0
  %892 = vmatpush1.bf16.msra.mxu0 %v858
  %893 = vmatprep.subr.bf16.mxu0 0
  %894 = vmatpush1.bf16.msra.mxu0 %v859
  %895 = vmatprep.subr.bf16.mxu0 0
  %896 = vmatpush1.bf16.msra.mxu0 %v860
  %897 = vmatprep.subr.bf16.mxu0 0
  %898 = vmatpush1.bf16.msra.mxu0 %v861
  %899 = vmatprep.subr.bf16.mxu0 0
  %900 = vmatpush1.bf16.msra.mxu0 %v862
  %901 = vmatprep.subr.bf16.mxu0 0
  %902 = vmatpush1.bf16.msra.mxu0 %v863
  %903 = vmatprep.subr.bf16.mxu0 0
  %904 = vmatpush1.bf16.msra.mxu0 %v864
  %905 = vmatprep.subr.bf16.mxu0 0
  %906 = vmatpush1.bf16.msra.mxu0 %v865
  %907 = vmatprep.subr.bf16.mxu0 0
  %908 = vmatpush1.bf16.msra.mxu0 %v866
  %909 = vmatprep.subr.bf16.mxu0 0
  %910 = vmatpush1.bf16.msra.mxu0 %v867
  %911 = vmatprep.subr.bf16.mxu0 0
  %912 = vmatpush1.bf16.msra.mxu0 %v868
  %913 = vmatprep.subr.bf16.mxu0 0
  %914 = vmatpush1.bf16.msra.mxu0 %v869
  %915 = vmatprep.subr.bf16.mxu0 0
  %916 = vmatpush1.bf16.msra.mxu0 %v870
  %917 = vmatprep.subr.bf16.mxu0 0
  %918 = vmatpush1.bf16.msra.mxu0 %v871
  %919 = vmatprep.subr.bf16.mxu0 0
  %920 = vmatpush1.bf16.msra.mxu0 %v872
  %921 = vmatprep.mubr.bf16.mxu0 %v753
  %922 = vmatmul.mubr.bf16.gmra.mrb[0].mxu0 %v752
  %v923 = vpop.f32.mrb[0].mxu0
  %v924 = vadd.f32 %v791, %v923
  %v925 = vpop.f32.mrb[0].mxu0
  %v926 = vpop.f32.mrb[0].mxu0
  %v927 = vpop.f32.mrb[0].mxu0
  %928 = vdwg.mxu0
  %v929 = vtanh.pop %v924
  %v930 = vmul.f32 %v929, 0.5
  %v931 = vadd.f32 %v930, 0.5
  %v932 = vld [vmem:[%s1] sm:$0x1]
  %v934 = vlaneseq
  %v935 = vshrl.u32 %v934, 7
  %v936 = vsub.s32 0, %v935
  %v937 = vrot.slane %v932, %v936
  %v939 = vmul.f32 %v931, %v937
  %940 = vst [vmem:[%s12] sm:$0xff] %v939
  // Predicated region
  $region50: #{_forward_impl.1} parent=0 // pred_check
    _
  $region51: #{_forward_impl.1} parent=0 // pred_check_branch
    %942 = sbr.rel (0) target = $region53
  $region52: #{_forward_impl.1} parent=0 // pred_region
    _
  $region53: #{_forward_impl.1} parent=0 // pred_fallthru
    _
  // Predicated region
  $region54: #{_forward_impl.1} parent=0 // pred_check
    _
  $region55: #{_forward_impl.1} parent=0 // pred_check_branch
    %944 = sbr.rel (0) target = $region57
  $region56: #{_forward_impl.1} parent=0 // pred_region
    _
  $region57: #{_forward_impl.1} parent=0 // pred_fallthru
    _

</llo_original>
